<compile_context>
chip_gen: v7x
topology: tpu7x:2x2x1
jax: 0.10.0
libtpu: 0.0.40
codegen_flags: <defaults>
</compile_context>

<pallas_src>
import jax
import jax.numpy as jnp
from jax.experimental import pallas as pl
from jax.experimental.pallas import tpu as pltpu


# ---------------------------------------------------------------------------
# Kernels
# ---------------------------------------------------------------------------
def elementwise_kernel(x_ref, y_ref, add_ref, mul_ref, sub_ref, div_ref, relu_ref):
    x = x_ref[...]
    y = y_ref[...]
    add_ref[...] = x + y
    mul_ref[...] = x * y
    sub_ref[...] = x - y
    div_ref[...] = x / y                      # exact division (matches torch.div)
    relu_ref[...] = jnp.maximum(x, 0.0)


def matmul_kernel(x_ref, y_ref, o_ref, acc_ref):
    @pl.when(pl.program_id(2) == 0)
    def _():
        acc_ref[...] = jnp.zeros_like(acc_ref)

    acc_ref[...] += jnp.dot(x_ref[...], y_ref[...],
                            preferred_element_type=jnp.float32)
    o_ref[...] = acc_ref[...].astype(o_ref.dtype)


# ---------------------------------------------------------------------------
# Helpers
# ---------------------------------------------------------------------------
def _pick_tile(dim, cap):
    """Largest multiple-of-128 tile <= cap that divides dim; else full dim."""
    if dim <= cap:
        return dim
    for t in (cap, 512, 256, 128):
        if t <= cap and dim % t == 0:
            return t
    return dim  # fallback: untiled along this dim


def _vmem_limit(needed_bytes):
    # 2x headroom, floor 32 MiB, ceiling 96 MiB (stays within scoped limits).
    return int(min(96 * 1024 * 1024, max(32 * 1024 * 1024, 2 * needed_bytes)))


# ---------------------------------------------------------------------------
# Pallas-call wrappers
# ---------------------------------------------------------------------------
def elementwise_ops(x, y, tile_cap=512):
    """Tiled, pipelined elementwise pass: returns (add, mul, sub, div, relu)."""
    M, N = x.shape
    tm = _pick_tile(M, tile_cap)
    tn = _pick_tile(N, tile_cap)
    grid = (M // tm, N // tn)

    spec = pl.BlockSpec((tm, tn), lambda i, j: (i, j))
    out_shape = tuple(jax.ShapeDtypeStruct((M, N), x.dtype) for _ in range(5))

    # 2 inputs + 5 outputs, double-buffered, f32 tiles.
    needed = 7 * 2 * tm * tn * 4

    return pl.pallas_call(
        elementwise_kernel,
        out_shape=out_shape,
        grid=grid,
        in_specs=[spec, spec],
        out_specs=tuple(pl.BlockSpec((tm, tn), lambda i, j: (i, j)) for _ in range(5)),
        compiler_params=pltpu.CompilerParams(
            dimension_semantics=("parallel", "parallel"),
            vmem_limit_bytes=_vmem_limit(needed),
        ),
    )(x, y)


def matmul_pallas(x, y, tm_cap=256, tn_cap=256, tk_cap=256):
    """Tiled matmul with f32 VMEM accumulator; returns x @ y."""
    M, K = x.shape
    K2, N = y.shape
    assert K == K2, "inner dimensions must match"

    tm = _pick_tile(M, tm_cap)
    tn = _pick_tile(N, tn_cap)
    tk = _pick_tile(K, tk_cap)
    grid = (M // tm, N // tn, K // tk)

    # inputs + output double-buffered, plus accumulator scratch (f32).
    needed = 2 * (tm * tk + tk * tn + tm * tn) * 4 + tm * tn * 4

    return pl.pallas_call(
        matmul_kernel,
        out_shape=jax.ShapeDtypeStruct((M, N), x.dtype),
        grid=grid,
        in_specs=[
            pl.BlockSpec((tm, tk), lambda i, j, k: (i, k)),
            pl.BlockSpec((tk, tn), lambda i, j, k: (k, j)),
        ],
        out_specs=pl.BlockSpec((tm, tn), lambda i, j, k: (i, j)),
        scratch_shapes=[pltpu.VMEM((tm, tn), jnp.float32)],
        compiler_params=pltpu.CompilerParams(
            dimension_semantics=("parallel", "parallel", "arbitrary"),
            vmem_limit_bytes=_vmem_limit(needed),
        ),
    )(x, y)


# ---------------------------------------------------------------------------
# Forward pass mirroring OperatorModel.forward
# ---------------------------------------------------------------------------
def operator_model(x, y):
    """print add/mul/sub/div/relu, return matmul(x, y) — all compute in Pallas."""
    assert x.ndim == 2 and y.ndim == 2 and x.shape == y.shape and x.shape[0] == x.shape[1], (
        "OperatorModel requires square, same-shape inputs (elementwise + matmul)")

    add_o, mul_o, sub_o, div_o, relu_o = elementwise_ops(x, y)
    mm_o = matmul_pallas(x, y)

    # Side effects of the PyTorch forward (prints), then return matmul result.
    print("Forward pass")
    print(add_o)
    print(mul_o)
    print(sub_o)
    print(div_o)
    print(relu_o)
    return mm_o


# ---------------------------------------------------------------------------
# Main
# ---------------------------------------------------------------------------
if __name__ == "__main__":
    key = jax.random.PRNGKey(0)
    kx, ky = jax.random.split(key)
    N = 256  # small square size; multiple of 128 so tiles stay lane-dense
    x = jax.random.normal(kx, (N, N), dtype=jnp.float32)
    # keep y away from zero so the printed division is finite (matches semantics)
    y = jax.random.normal(ky, (N, N), dtype=jnp.float32) + 2.0

    out = operator_model(x, y)
    out = jax.block_until_ready(out)

    # correctness checks vs. plain JAX references
    assert jnp.allclose(out, x @ y, atol=1e-4, rtol=1e-4), "matmul mismatch"
    add_o, mul_o, sub_o, div_o, relu_o = elementwise_ops(x, y)
    jax.block_until_ready((add_o, mul_o, sub_o, div_o, relu_o))
    assert jnp.allclose(add_o, x + y, atol=1e-6), "add mismatch"
    assert jnp.allclose(mul_o, x * y, atol=1e-6), "mul mismatch"
    assert jnp.allclose(sub_o, x - y, atol=1e-6), "sub mismatch"
    assert jnp.allclose(div_o, x / y, atol=1e-5, rtol=1e-5), "div mismatch"
    assert jnp.allclose(relu_o, jnp.maximum(x, 0.0), atol=1e-6), "relu mismatch"

    print("KERNEL_OK")
</pallas_src>

<mosaic_0001>
module attributes {stable_mosaic.version = 11 : i64} {
  func.func @elementwise_kernel(%arg0: i32, %arg1: i32, %arg2: memref<256x256xf32, #tpu.memory_space<vmem>>, %arg3: memref<256x256xf32, #tpu.memory_space<vmem>>, %arg4: memref<256x256xf32, #tpu.memory_space<vmem>>, %arg5: memref<256x256xf32, #tpu.memory_space<vmem>>, %arg6: memref<256x256xf32, #tpu.memory_space<vmem>>, %arg7: memref<256x256xf32, #tpu.memory_space<vmem>>, %arg8: memref<256x256xf32, #tpu.memory_space<vmem>>) attributes {dimension_semantics = [#tpu.dimension_semantics<parallel>, #tpu.dimension_semantics<parallel>], iteration_bounds = array<i64: 1, 1>, scalar_prefetch = 0 : i64, scratch_operands = 0 : i64, tpu.core_type = #tpu.core_type<tc>, window_params = [{transform_indices = @transform_0, window_bounds = array<i64: 256, 256>}, {transform_indices = @transform_1, window_bounds = array<i64: 256, 256>}, {transform_indices = @transform_2, window_bounds = array<i64: 256, 256>}, {transform_indices = @transform_3, window_bounds = array<i64: 256, 256>}, {transform_indices = @transform_4, window_bounds = array<i64: 256, 256>}, {transform_indices = @transform_5, window_bounds = array<i64: 256, 256>}, {transform_indices = @transform_6, window_bounds = array<i64: 256, 256>}]} {
    %c0 = arith.constant 0 : index
    %c0_0 = arith.constant 0 : index
    %0 = vector.load %arg2[%c0, %c0_0] : memref<256x256xf32, #tpu.memory_space<vmem>>, vector<256x256xf32>
    %c0_1 = arith.constant 0 : index
    %c0_2 = arith.constant 0 : index
    %1 = vector.load %arg3[%c0_1, %c0_2] : memref<256x256xf32, #tpu.memory_space<vmem>>, vector<256x256xf32>
    %2 = arith.addf %0, %1 : vector<256x256xf32>
    %c0_3 = arith.constant 0 : index
    %c0_4 = arith.constant 0 : index
    %3 = vector.load %arg4[%c0_3, %c0_4] : memref<256x256xf32, #tpu.memory_space<vmem>>, vector<256x256xf32>
    tpu.vector_store %arg4[%c0_3, %c0_4], %2 {strides = array<i32>} : memref<256x256xf32, #tpu.memory_space<vmem>>, vector<256x256xf32>,
    %4 = arith.mulf %0, %1 : vector<256x256xf32>
    %c0_5 = arith.constant 0 : index
    %c0_6 = arith.constant 0 : index
    %5 = vector.load %arg5[%c0_5, %c0_6] : memref<256x256xf32, #tpu.memory_space<vmem>>, vector<256x256xf32>
    tpu.vector_store %arg5[%c0_5, %c0_6], %4 {strides = array<i32>} : memref<256x256xf32, #tpu.memory_space<vmem>>, vector<256x256xf32>,
    %6 = arith.subf %0, %1 : vector<256x256xf32>
    %c0_7 = arith.constant 0 : index
    %c0_8 = arith.constant 0 : index
    %7 = vector.load %arg6[%c0_7, %c0_8] : memref<256x256xf32, #tpu.memory_space<vmem>>, vector<256x256xf32>
    tpu.vector_store %arg6[%c0_7, %c0_8], %6 {strides = array<i32>} : memref<256x256xf32, #tpu.memory_space<vmem>>, vector<256x256xf32>,
    %8 = arith.divf %0, %1 : vector<256x256xf32>
    %c0_9 = arith.constant 0 : index
    %c0_10 = arith.constant 0 : index
    %9 = vector.load %arg7[%c0_9, %c0_10] : memref<256x256xf32, #tpu.memory_space<vmem>>, vector<256x256xf32>
    tpu.vector_store %arg7[%c0_9, %c0_10], %8 {strides = array<i32>} : memref<256x256xf32, #tpu.memory_space<vmem>>, vector<256x256xf32>,
    %cst = arith.constant 0.000000e+00 : f32
    %10 = vector.broadcast %cst : f32 to vector<256x256xf32>
    %11 = arith.maximumf %0, %10 : vector<256x256xf32>
    %c0_11 = arith.constant 0 : index
    %c0_12 = arith.constant 0 : index
    %12 = vector.load %arg8[%c0_11, %c0_12] : memref<256x256xf32, #tpu.memory_space<vmem>>, vector<256x256xf32>
    tpu.vector_store %arg8[%c0_11, %c0_12], %11 {strides = array<i32>} : memref<256x256xf32, #tpu.memory_space<vmem>>, vector<256x256xf32>,
    return
  }
  func.func @transform_0(%arg0: i32, %arg1: i32) -> (i32, i32) {
    %c0_i32 = arith.constant 0 : i32
    return %arg0, %arg1 : i32, i32
  }
  func.func @transform_1(%arg0: i32, %arg1: i32) -> (i32, i32) {
    %c0_i32 = arith.constant 0 : i32
    return %arg0, %arg1 : i32, i32
  }
  func.func @transform_2(%arg0: i32, %arg1: i32) -> (i32, i32) {
    %c0_i32 = arith.constant 0 : i32
    return %arg0, %arg1 : i32, i32
  }
  func.func @transform_3(%arg0: i32, %arg1: i32) -> (i32, i32) {
    %c0_i32 = arith.constant 0 : i32
    return %arg0, %arg1 : i32, i32
  }
  func.func @transform_4(%arg0: i32, %arg1: i32) -> (i32, i32) {
    %c0_i32 = arith.constant 0 : i32
    return %arg0, %arg1 : i32, i32
  }
  func.func @transform_5(%arg0: i32, %arg1: i32) -> (i32, i32) {
    %c0_i32 = arith.constant 0 : i32
    return %arg0, %arg1 : i32, i32
  }
  func.func @transform_6(%arg0: i32, %arg1: i32) -> (i32, i32) {
    %c0_i32 = arith.constant 0 : i32
    return %arg0, %arg1 : i32, i32
  }
}

</mosaic_0001>

<llo_original>
// kernel: tpu_custom_call.1
$region0: #{tpu_custom_call.1}
  #allocation0 [shape = 'u32[]', space=smem, size = 0x4, offset = 0x4, fixed_abs, tag = 'smem constant byte address 0x4 - core index']
  #allocation1 [shape = 'u32[144,128]{1,0:T(1,128)}', space=vmem, size = 0x12000, scoped, tag = 'internal scratch']
  %s0 = inlined_call_operand.hbm [shape: f32[256,256], index: 0, kind: input, shape index: {}]
  %s1 = inlined_call_operand.hbm [shape: f32[256,256], index: 1, kind: input, shape index: {}]
  %s2 = inlined_call_operand.hbm [shape: f32[256,256], index: 2, kind: output, shape index: {0}]
  %s3 = inlined_call_operand.hbm [shape: f32[256,256], index: 3, kind: output, shape index: {1}]
  %s4 = inlined_call_operand.hbm [shape: f32[256,256], index: 4, kind: output, shape index: {2}]
  %s5 = inlined_call_operand.hbm [shape: f32[256,256], index: 5, kind: output, shape index: {3}]
  %s6 = inlined_call_operand.hbm [shape: f32[256,256], index: 6, kind: output, shape index: {4}]
  %7 = xla_tuple %s2, %s3, %s4, %s5, %s6
  %s8 = sld [smem:[#allocation0]]
  $region58: #{tpu_custom_call.1} parent=0
    _
  %s10 = ssub.s32 1, %s8
  %s11 = scalar_select 0, %s10, %s8
  $region1: #{tpu_custom_call.1} parent=0
    #allocation2 [shape = 'u8[262144]{0}', space=vmem, size = 0x40000, scoped, tag = 'input window, operand 0, single buffered']
    #allocation3 [shape = 's32[1]{0}', space=sflag, size = 0x4, scoped, tag = 'scoped memory for tpu_custom_call.1']
    #allocation4 [shape = 's32[1]{0}', space=sflag, size = 0x4, scoped, tag = 'scoped memory for tpu_custom_call.1']
    #allocation5 [shape = 'u8[262144]{0}', space=vmem, size = 0x40000, scoped, tag = 'input window, operand 1, single buffered']
    #allocation6 [shape = 's32[1]{0}', space=sflag, size = 0x4, scoped, tag = 'scoped memory for tpu_custom_call.1']
    #allocation7 [shape = 'u8[262144]{0}', space=vmem, size = 0x40000, scoped, tag = 'output window, operand 0, single buffered']
    #allocation8 [shape = 'u8[262144]{0}', space=vmem, size = 0x40000, scoped, tag = 'output window, operand 1, single buffered']
    #allocation9 [shape = 's32[1]{0}', space=sflag, size = 0x4, scoped, tag = 'scoped memory for tpu_custom_call.1']
    #allocation10 [shape = 'u8[262144]{0}', space=vmem, size = 0x40000, scoped, tag = 'output window, operand 2, single buffered']
    #allocation11 [shape = 'u8[262144]{0}', space=vmem, size = 0x40000, scoped, tag = 'output window, operand 3, single buffered']
    #allocation12 [shape = 's32[1]{0}', space=sflag, size = 0x4, scoped, tag = 'scoped memory for tpu_custom_call.1']
    #allocation13 [shape = 'u8[262144]{0}', space=vmem, size = 0x40000, scoped, tag = 'output window, operand 4, single buffered']
    %12 = vsyncpa [#allocation3], 0
    %13 = vsyncpa [#allocation6], 0
    %14 = vsyncpa [#allocation4], 0
    %15 = vsyncpa [#allocation9], 0
    %16 = vsyncpa [#allocation12], 0
    // Predicated region
    $region2: #{tpu_custom_call.1} parent=1 // pred_check
      _
    $region3: #{tpu_custom_call.1} parent=1 // pred_check_branch
      %18 = sbr.rel (0) target = $region5
    $region4: #{tpu_custom_call.1} parent=1 // pred_region
      %s20 = ssub.s32 8192, 8192
      %21 = vsyncadd [#allocation3], %s20
      %s22 = sshll.u32 [#allocation2], 4
      %s23 = int_to_ptr.vmem [resolvable:$true] %s22
      %28 = dma.hbm_to_vmem [thread:$0]  %s0, 8192, %s23, [#allocation3], 256, 256, 16
    $region5: #{tpu_custom_call.1} parent=1 // pred_fallthru
      _
    // Predicated region
    $region6: #{tpu_custom_call.1} parent=1 // pred_check
      _
    $region7: #{tpu_custom_call.1} parent=1 // pred_check_branch
      %30 = sbr.rel (0) target = $region9
    $region8: #{tpu_custom_call.1} parent=1 // pred_region
      %s32 = ssub.s32 8192, 8192
      %33 = vsyncadd [#allocation6], %s32
      %s34 = sshll.u32 [#allocation5], 4
      %s35 = int_to_ptr.vmem [resolvable:$true] %s34
      %40 = dma.hbm_to_vmem [thread:$0]  %s1, 8192, %s35, [#allocation6], 256, 256, 16
    $region9: #{tpu_custom_call.1} parent=1 // pred_fallthru
      _
    // Predicated region
    $region10: #{tpu_custom_call.1} parent=1 // pred_check
      _
    $region11: #{tpu_custom_call.1} parent=1 // pred_check_branch
      %42 = sbr.rel (0) target = $region13
    $region12: #{tpu_custom_call.1} parent=1 // pred_region
      %43 = dma.done [#allocation3], 8192
    $region13: #{tpu_custom_call.1} parent=1 // pred_fallthru
      _
    // Predicated region
    $region14: #{tpu_custom_call.1} parent=1 // pred_check
      _
    $region15: #{tpu_custom_call.1} parent=1 // pred_check_branch
      %45 = sbr.rel (0) target = $region17
    $region16: #{tpu_custom_call.1} parent=1 // pred_region
      %46 = dma.done [#allocation6], 8192
    $region17: #{tpu_custom_call.1} parent=1 // pred_fallthru
      _
    %v47 = vld [vmem:[#allocation2] sm:$0xff]
    %v48 = vld [vmem:[#allocation2 + $0x8] sm:$0xff]
    %v49 = vld [vmem:[#allocation2 + $0x10] sm:$0xff]
    %v50 = vld [vmem:[#allocation2 + $0x18] sm:$0xff]
    %v51 = vld [vmem:[#allocation2 + $0x20] sm:$0xff]
    %v52 = vld [vmem:[#allocation2 + $0x28] sm:$0xff]
    %v53 = vld [vmem:[#allocation2 + $0x30] sm:$0xff]
    %v54 = vld [vmem:[#allocation2 + $0x38] sm:$0xff]
    %v55 = vld [vmem:[#allocation2 + $0x40] sm:$0xff]
    %v56 = vld [vmem:[#allocation2 + $0x48] sm:$0xff]
    %v57 = vld [vmem:[#allocation2 + $0x50] sm:$0xff]
    %v58 = vld [vmem:[#allocation2 + $0x58] sm:$0xff]
    %v59 = vld [vmem:[#allocation2 + $0x60] sm:$0xff]
    %v60 = vld [vmem:[#allocation2 + $0x68] sm:$0xff]
    %v61 = vld [vmem:[#allocation2 + $0x70] sm:$0xff]
    %v62 = vld [vmem:[#allocation2 + $0x78] sm:$0xff]
    %v63 = vld [vmem:[#allocation2 + $0x80] sm:$0xff]
    %v64 = vld [vmem:[#allocation2 + $0x88] sm:$0xff]
    %v65 = vld [vmem:[#allocation2 + $0x90] sm:$0xff]
    %v66 = vld [vmem:[#allocation2 + $0x98] sm:$0xff]
    %v67 = vld [vmem:[#allocation2 + $0xa0] sm:$0xff]
    %v68 = vld [vmem:[#allocation2 + $0xa8] sm:$0xff]
    %v69 = vld [vmem:[#allocation2 + $0xb0] sm:$0xff]
    %v70 = vld [vmem:[#allocation2 + $0xb8] sm:$0xff]
    %v71 = vld [vmem:[#allocation2 + $0xc0] sm:$0xff]
    %v72 = vld [vmem:[#allocation2 + $0xc8] sm:$0xff]
    %v73 = vld [vmem:[#allocation2 + $0xd0] sm:$0xff]
    %v74 = vld [vmem:[#allocation2 + $0xd8] sm:$0xff]
    %v75 = vld [vmem:[#allocation2 + $0xe0] sm:$0xff]
    %v76 = vld [vmem:[#allocation2 + $0xe8] sm:$0xff]
    %v77 = vld [vmem:[#allocation2 + $0xf0] sm:$0xff]
    %v78 = vld [vmem:[#allocation2 + $0xf8] sm:$0xff]
    %v79 = vld [vmem:[#allocation2 + $0x100] sm:$0xff]
    %v80 = vld [vmem:[#allocation2 + $0x108] sm:$0xff]
    %v81 = vld [vmem:[#allocation2 + $0x110] sm:$0xff]
    %v82 = vld [vmem:[#allocation2 + $0x118] sm:$0xff]
    %v83 = vld [vmem:[#allocation2 + $0x120] sm:$0xff]
    %v84 = vld [vmem:[#allocation2 + $0x128] sm:$0xff]
    %v85 = vld [vmem:[#allocation2 + $0x130] sm:$0xff]
    %v86 = vld [vmem:[#allocation2 + $0x138] sm:$0xff]
    %v87 = vld [vmem:[#allocation2 + $0x140] sm:$0xff]
    %v88 = vld [vmem:[#allocation2 + $0x148] sm:$0xff]
    %v89 = vld [vmem:[#allocation2 + $0x150] sm:$0xff]
    %v90 = vld [vmem:[#allocation2 + $0x158] sm:$0xff]
    %v91 = vld [vmem:[#allocation2 + $0x160] sm:$0xff]
    %v92 = vld [vmem:[#allocation2 + $0x168] sm:$0xff]
    %v93 = vld [vmem:[#allocation2 + $0x170] sm:$0xff]
    %v94 = vld [vmem:[#allocation2 + $0x178] sm:$0xff]
    %v95 = vld [vmem:[#allocation2 + $0x180] sm:$0xff]
    %v96 = vld [vmem:[#allocation2 + $0x188] sm:$0xff]
    %v97 = vld [vmem:[#allocation2 + $0x190] sm:$0xff]
    %v98 = vld [vmem:[#allocation2 + $0x198] sm:$0xff]
    %v99 = vld [vmem:[#allocation2 + $0x1a0] sm:$0xff]
    %v100 = vld [vmem:[#allocation2 + $0x1a8] sm:$0xff]
    %v101 = vld [vmem:[#allocation2 + $0x1b0] sm:$0xff]
    %v102 = vld [vmem:[#allocation2 + $0x1b8] sm:$0xff]
    %v103 = vld [vmem:[#allocation2 + $0x1c0] sm:$0xff]
    %v104 = vld [vmem:[#allocation2 + $0x1c8] sm:$0xff]
    %v105 = vld [vmem:[#allocation2 + $0x1d0] sm:$0xff]
    %v106 = vld [vmem:[#allocation2 + $0x1d8] sm:$0xff]
    %v107 = vld [vmem:[#allocation2 + $0x1e0] sm:$0xff]
    %v108 = vld [vmem:[#allocation2 + $0x1e8] sm:$0xff]
    %v109 = vld [vmem:[#allocation2 + $0x1f0] sm:$0xff]
    %v110 = vld [vmem:[#allocation2 + $0x1f8] sm:$0xff]
    %v111 = vld [vmem:[#allocation5] sm:$0xff]
    %v112 = vld [vmem:[#allocation5 + $0x8] sm:$0xff]
    %v113 = vld [vmem:[#allocation5 + $0x10] sm:$0xff]
    %v114 = vld [vmem:[#allocation5 + $0x18] sm:$0xff]
    %v115 = vld [vmem:[#allocation5 + $0x20] sm:$0xff]
    %v116 = vld [vmem:[#allocation5 + $0x28] sm:$0xff]
    %v117 = vld [vmem:[#allocation5 + $0x30] sm:$0xff]
    %v118 = vld [vmem:[#allocation5 + $0x38] sm:$0xff]
    %v119 = vld [vmem:[#allocation5 + $0x40] sm:$0xff]
    %v120 = vld [vmem:[#allocation5 + $0x48] sm:$0xff]
    %v121 = vld [vmem:[#allocation5 + $0x50] sm:$0xff]
    %v122 = vld [vmem:[#allocation5 + $0x58] sm:$0xff]
    %v123 = vld [vmem:[#allocation5 + $0x60] sm:$0xff]
    %v124 = vld [vmem:[#allocation5 + $0x68] sm:$0xff]
    %v125 = vld [vmem:[#allocation5 + $0x70] sm:$0xff]
    %v126 = vld [vmem:[#allocation5 + $0x78] sm:$0xff]
    %v127 = vld [vmem:[#allocation5 + $0x80] sm:$0xff]
    %v128 = vld [vmem:[#allocation5 + $0x88] sm:$0xff]
    %v129 = vld [vmem:[#allocation5 + $0x90] sm:$0xff]
    %v130 = vld [vmem:[#allocation5 + $0x98] sm:$0xff]
    %v131 = vld [vmem:[#allocation5 + $0xa0] sm:$0xff]
    %v132 = vld [vmem:[#allocation5 + $0xa8] sm:$0xff]
    %v133 = vld [vmem:[#allocation5 + $0xb0] sm:$0xff]
    %v134 = vld [vmem:[#allocation5 + $0xb8] sm:$0xff]
    %v135 = vld [vmem:[#allocation5 + $0xc0] sm:$0xff]
    %v136 = vld [vmem:[#allocation5 + $0xc8] sm:$0xff]
    %v137 = vld [vmem:[#allocation5 + $0xd0] sm:$0xff]
    %v138 = vld [vmem:[#allocation5 + $0xd8] sm:$0xff]
    %v139 = vld [vmem:[#allocation5 + $0xe0] sm:$0xff]
    %v140 = vld [vmem:[#allocation5 + $0xe8] sm:$0xff]
    %v141 = vld [vmem:[#allocation5 + $0xf0] sm:$0xff]
    %v142 = vld [vmem:[#allocation5 + $0xf8] sm:$0xff]
    %v143 = vld [vmem:[#allocation5 + $0x100] sm:$0xff]
    %v144 = vld [vmem:[#allocation5 + $0x108] sm:$0xff]
    %v145 = vld [vmem:[#allocation5 + $0x110] sm:$0xff]
    %v146 = vld [vmem:[#allocation5 + $0x118] sm:$0xff]
    %v147 = vld [vmem:[#allocation5 + $0x120] sm:$0xff]
    %v148 = vld [vmem:[#allocation5 + $0x128] sm:$0xff]
    %v149 = vld [vmem:[#allocation5 + $0x130] sm:$0xff]
    %v150 = vld [vmem:[#allocation5 + $0x138] sm:$0xff]
    %v151 = vld [vmem:[#allocation5 + $0x140] sm:$0xff]
    %v152 = vld [vmem:[#allocation5 + $0x148] sm:$0xff]
    %v153 = vld [vmem:[#allocation5 + $0x150] sm:$0xff]
    %v154 = vld [vmem:[#allocation5 + $0x158] sm:$0xff]
    %v155 = vld [vmem:[#allocation5 + $0x160] sm:$0xff]
    %v156 = vld [vmem:[#allocation5 + $0x168] sm:$0xff]
    %v157 = vld [vmem:[#allocation5 + $0x170] sm:$0xff]
    %v158 = vld [vmem:[#allocation5 + $0x178] sm:$0xff]
    %v159 = vld [vmem:[#allocation5 + $0x180] sm:$0xff]
    %v160 = vld [vmem:[#allocation5 + $0x188] sm:$0xff]
    %v161 = vld [vmem:[#allocation5 + $0x190] sm:$0xff]
    %v162 = vld [vmem:[#allocation5 + $0x198] sm:$0xff]
    %v163 = vld [vmem:[#allocation5 + $0x1a0] sm:$0xff]
    %v164 = vld [vmem:[#allocation5 + $0x1a8] sm:$0xff]
    %v165 = vld [vmem:[#allocation5 + $0x1b0] sm:$0xff]
    %v166 = vld [vmem:[#allocation5 + $0x1b8] sm:$0xff]
    %v167 = vld [vmem:[#allocation5 + $0x1c0] sm:$0xff]
    %v168 = vld [vmem:[#allocation5 + $0x1c8] sm:$0xff]
    %v169 = vld [vmem:[#allocation5 + $0x1d0] sm:$0xff]
    %v170 = vld [vmem:[#allocation5 + $0x1d8] sm:$0xff]
    %v171 = vld [vmem:[#allocation5 + $0x1e0] sm:$0xff]
    %v172 = vld [vmem:[#allocation5 + $0x1e8] sm:$0xff]
    %v173 = vld [vmem:[#allocation5 + $0x1f0] sm:$0xff]
    %v174 = vld [vmem:[#allocation5 + $0x1f8] sm:$0xff]
    %v175 = vadd.f32 %v47, %v111
    %v176 = vadd.f32 %v48, %v112
    %v177 = vadd.f32 %v49, %v113
    %v178 = vadd.f32 %v50, %v114
    %v179 = vadd.f32 %v51, %v115
    %v180 = vadd.f32 %v52, %v116
    %v181 = vadd.f32 %v53, %v117
    %v182 = vadd.f32 %v54, %v118
    %v183 = vadd.f32 %v55, %v119
    %v184 = vadd.f32 %v56, %v120
    %v185 = vadd.f32 %v57, %v121
    %v186 = vadd.f32 %v58, %v122
    %v187 = vadd.f32 %v59, %v123
    %v188 = vadd.f32 %v60, %v124
    %v189 = vadd.f32 %v61, %v125
    %v190 = vadd.f32 %v62, %v126
    %v191 = vadd.f32 %v63, %v127
    %v192 = vadd.f32 %v64, %v128
    %v193 = vadd.f32 %v65, %v129
    %v194 = vadd.f32 %v66, %v130
    %v195 = vadd.f32 %v67, %v131
    %v196 = vadd.f32 %v68, %v132
    %v197 = vadd.f32 %v69, %v133
    %v198 = vadd.f32 %v70, %v134
    %v199 = vadd.f32 %v71, %v135
    %v200 = vadd.f32 %v72, %v136
    %v201 = vadd.f32 %v73, %v137
    %v202 = vadd.f32 %v74, %v138
    %v203 = vadd.f32 %v75, %v139
    %v204 = vadd.f32 %v76, %v140
    %v205 = vadd.f32 %v77, %v141
    %v206 = vadd.f32 %v78, %v142
    %v207 = vadd.f32 %v79, %v143
    %v208 = vadd.f32 %v80, %v144
    %v209 = vadd.f32 %v81, %v145
    %v210 = vadd.f32 %v82, %v146
    %v211 = vadd.f32 %v83, %v147
    %v212 = vadd.f32 %v84, %v148
    %v213 = vadd.f32 %v85, %v149
    %v214 = vadd.f32 %v86, %v150
    %v215 = vadd.f32 %v87, %v151
    %v216 = vadd.f32 %v88, %v152
    %v217 = vadd.f32 %v89, %v153
    %v218 = vadd.f32 %v90, %v154
    %v219 = vadd.f32 %v91, %v155
    %v220 = vadd.f32 %v92, %v156
    %v221 = vadd.f32 %v93, %v157
    %v222 = vadd.f32 %v94, %v158
    %v223 = vadd.f32 %v95, %v159
    %v224 = vadd.f32 %v96, %v160
    %v225 = vadd.f32 %v97, %v161
    %v226 = vadd.f32 %v98, %v162
    %v227 = vadd.f32 %v99, %v163
    %v228 = vadd.f32 %v100, %v164
    %v229 = vadd.f32 %v101, %v165
    %v230 = vadd.f32 %v102, %v166
    %v231 = vadd.f32 %v103, %v167
    %v232 = vadd.f32 %v104, %v168
    %v233 = vadd.f32 %v105, %v169
    %v234 = vadd.f32 %v106, %v170
    %v235 = vadd.f32 %v107, %v171
    %v236 = vadd.f32 %v108, %v172
    %v237 = vadd.f32 %v109, %v173
    %v238 = vadd.f32 %v110, %v174
    %239 = vst [vmem:[#allocation7] sm:$0xff] %v175
    %240 = vst [vmem:[#allocation7 + $0x8] sm:$0xff] %v176
    %241 = vst [vmem:[#allocation7 + $0x10] sm:$0xff] %v177
    %242 = vst [vmem:[#allocation7 + $0x18] sm:$0xff] %v178
    %243 = vst [vmem:[#allocation7 + $0x20] sm:$0xff] %v179
    %244 = vst [vmem:[#allocation7 + $0x28] sm:$0xff] %v180
    %245 = vst [vmem:[#allocation7 + $0x30] sm:$0xff] %v181
    %246 = vst [vmem:[#allocation7 + $0x38] sm:$0xff] %v182
    %247 = vst [vmem:[#allocation7 + $0x40] sm:$0xff] %v183
    %248 = vst [vmem:[#allocation7 + $0x48] sm:$0xff] %v184
    %249 = vst [vmem:[#allocation7 + $0x50] sm:$0xff] %v185
    %250 = vst [vmem:[#allocation7 + $0x58] sm:$0xff] %v186
    %251 = vst [vmem:[#allocation7 + $0x60] sm:$0xff] %v187
    %252 = vst [vmem:[#allocation7 + $0x68] sm:$0xff] %v188
    %253 = vst [vmem:[#allocation7 + $0x70] sm:$0xff] %v189
    %254 = vst [vmem:[#allocation7 + $0x78] sm:$0xff] %v190
    %255 = vst [vmem:[#allocation7 + $0x80] sm:$0xff] %v191
    %256 = vst [vmem:[#allocation7 + $0x88] sm:$0xff] %v192
    %257 = vst [vmem:[#allocation7 + $0x90] sm:$0xff] %v193
    %258 = vst [vmem:[#allocation7 + $0x98] sm:$0xff] %v194
    %259 = vst [vmem:[#allocation7 + $0xa0] sm:$0xff] %v195
    %260 = vst [vmem:[#allocation7 + $0xa8] sm:$0xff] %v196
    %261 = vst [vmem:[#allocation7 + $0xb0] sm:$0xff] %v197
    %262 = vst [vmem:[#allocation7 + $0xb8] sm:$0xff] %v198
    %263 = vst [vmem:[#allocation7 + $0xc0] sm:$0xff] %v199
    %264 = vst [vmem:[#allocation7 + $0xc8] sm:$0xff] %v200
    %265 = vst [vmem:[#allocation7 + $0xd0] sm:$0xff] %v201
    %266 = vst [vmem:[#allocation7 + $0xd8] sm:$0xff] %v202
    %267 = vst [vmem:[#allocation7 + $0xe0] sm:$0xff] %v203
    %268 = vst [vmem:[#allocation7 + $0xe8] sm:$0xff] %v204
    %269 = vst [vmem:[#allocation7 + $0xf0] sm:$0xff] %v205
    %270 = vst [vmem:[#allocation7 + $0xf8] sm:$0xff] %v206
    %271 = vst [vmem:[#allocation7 + $0x100] sm:$0xff] %v207
    %272 = vst [vmem:[#allocation7 + $0x108] sm:$0xff] %v208
    %273 = vst [vmem:[#allocation7 + $0x110] sm:$0xff] %v209
    %274 = vst [vmem:[#allocation7 + $0x118] sm:$0xff] %v210
    %275 = vst [vmem:[#allocation7 + $0x120] sm:$0xff] %v211
    %276 = vst [vmem:[#allocation7 + $0x128] sm:$0xff] %v212
    %277 = vst [vmem:[#allocation7 + $0x130] sm:$0xff] %v213
    %278 = vst [vmem:[#allocation7 + $0x138] sm:$0xff] %v214
    %279 = vst [vmem:[#allocation7 + $0x140] sm:$0xff] %v215
    %280 = vst [vmem:[#allocation7 + $0x148] sm:$0xff] %v216
    %281 = vst [vmem:[#allocation7 + $0x150] sm:$0xff] %v217
    %282 = vst [vmem:[#allocation7 + $0x158] sm:$0xff] %v218
    %283 = vst [vmem:[#allocation7 + $0x160] sm:$0xff] %v219
    %284 = vst [vmem:[#allocation7 + $0x168] sm:$0xff] %v220
    %285 = vst [vmem:[#allocation7 + $0x170] sm:$0xff] %v221
    %286 = vst [vmem:[#allocation7 + $0x178] sm:$0xff] %v222
    %287 = vst [vmem:[#allocation7 + $0x180] sm:$0xff] %v223
    %288 = vst [vmem:[#allocation7 + $0x188] sm:$0xff] %v224
    %289 = vst [vmem:[#allocation7 + $0x190] sm:$0xff] %v225
    %290 = vst [vmem:[#allocation7 + $0x198] sm:$0xff] %v226
    %291 = vst [vmem:[#allocation7 + $0x1a0] sm:$0xff] %v227
    %292 = vst [vmem:[#allocation7 + $0x1a8] sm:$0xff] %v228
    %293 = vst [vmem:[#allocation7 + $0x1b0] sm:$0xff] %v229
    %294 = vst [vmem:[#allocation7 + $0x1b8] sm:$0xff] %v230
    %295 = vst [vmem:[#allocation7 + $0x1c0] sm:$0xff] %v231
    %296 = vst [vmem:[#allocation7 + $0x1c8] sm:$0xff] %v232
    %297 = vst [vmem:[#allocation7 + $0x1d0] sm:$0xff] %v233
    %298 = vst [vmem:[#allocation7 + $0x1d8] sm:$0xff] %v234
    %299 = vst [vmem:[#allocation7 + $0x1e0] sm:$0xff] %v235
    %300 = vst [vmem:[#allocation7 + $0x1e8] sm:$0xff] %v236
    %301 = vst [vmem:[#allocation7 + $0x1f0] sm:$0xff] %v237
    %302 = vst [vmem:[#allocation7 + $0x1f8] sm:$0xff] %v238
    %v303 = vmul.f32 %v47, %v111
    %v304 = vmul.f32 %v48, %v112
    %v305 = vmul.f32 %v49, %v113
    %v306 = vmul.f32 %v50, %v114
    %v307 = vmul.f32 %v51, %v115
    %v308 = vmul.f32 %v52, %v116
    %v309 = vmul.f32 %v53, %v117
    %v310 = vmul.f32 %v54, %v118
    %v311 = vmul.f32 %v55, %v119
    %v312 = vmul.f32 %v56, %v120
    %v313 = vmul.f32 %v57, %v121
    %v314 = vmul.f32 %v58, %v122
    %v315 = vmul.f32 %v59, %v123
    %v316 = vmul.f32 %v60, %v124
    %v317 = vmul.f32 %v61, %v125
    %v318 = vmul.f32 %v62, %v126
    %v319 = vmul.f32 %v63, %v127
    %v320 = vmul.f32 %v64, %v128
    %v321 = vmul.f32 %v65, %v129
    %v322 = vmul.f32 %v66, %v130
    %v323 = vmul.f32 %v67, %v131
    %v324 = vmul.f32 %v68, %v132
    %v325 = vmul.f32 %v69, %v133
    %v326 = vmul.f32 %v70, %v134
    %v327 = vmul.f32 %v71, %v135
    %v328 = vmul.f32 %v72, %v136
    %v329 = vmul.f32 %v73, %v137
    %v330 = vmul.f32 %v74, %v138
    %v331 = vmul.f32 %v75, %v139
    %v332 = vmul.f32 %v76, %v140
    %v333 = vmul.f32 %v77, %v141
    %v334 = vmul.f32 %v78, %v142
    %v335 = vmul.f32 %v79, %v143
    %v336 = vmul.f32 %v80, %v144
    %v337 = vmul.f32 %v81, %v145
    %v338 = vmul.f32 %v82, %v146
    %v339 = vmul.f32 %v83, %v147
    %v340 = vmul.f32 %v84, %v148
    %v341 = vmul.f32 %v85, %v149
    %v342 = vmul.f32 %v86, %v150
    %v343 = vmul.f32 %v87, %v151
    %v344 = vmul.f32 %v88, %v152
    %v345 = vmul.f32 %v89, %v153
    %v346 = vmul.f32 %v90, %v154
    %v347 = vmul.f32 %v91, %v155
    %v348 = vmul.f32 %v92, %v156
    %v349 = vmul.f32 %v93, %v157
    %v350 = vmul.f32 %v94, %v158
    %v351 = vmul.f32 %v95, %v159
    %v352 = vmul.f32 %v96, %v160
    %v353 = vmul.f32 %v97, %v161
    %v354 = vmul.f32 %v98, %v162
    %v355 = vmul.f32 %v99, %v163
    %v356 = vmul.f32 %v100, %v164
    %v357 = vmul.f32 %v101, %v165
    %v358 = vmul.f32 %v102, %v166
    %v359 = vmul.f32 %v103, %v167
    %v360 = vmul.f32 %v104, %v168
    %v361 = vmul.f32 %v105, %v169
    %v362 = vmul.f32 %v106, %v170
    %v363 = vmul.f32 %v107, %v171
    %v364 = vmul.f32 %v108, %v172
    %v365 = vmul.f32 %v109, %v173
    %v366 = vmul.f32 %v110, %v174
    %367 = vst [vmem:[#allocation8] sm:$0xff] %v303
    %368 = vst [vmem:[#allocation8 + $0x8] sm:$0xff] %v304
    %369 = vst [vmem:[#allocation8 + $0x10] sm:$0xff] %v305
    %370 = vst [vmem:[#allocation8 + $0x18] sm:$0xff] %v306
    %371 = vst [vmem:[#allocation8 + $0x20] sm:$0xff] %v307
    %372 = vst [vmem:[#allocation8 + $0x28] sm:$0xff] %v308
    %373 = vst [vmem:[#allocation8 + $0x30] sm:$0xff] %v309
    %374 = vst [vmem:[#allocation8 + $0x38] sm:$0xff] %v310
    %375 = vst [vmem:[#allocation8 + $0x40] sm:$0xff] %v311
    %376 = vst [vmem:[#allocation8 + $0x48] sm:$0xff] %v312
    %377 = vst [vmem:[#allocation8 + $0x50] sm:$0xff] %v313
    %378 = vst [vmem:[#allocation8 + $0x58] sm:$0xff] %v314
    %379 = vst [vmem:[#allocation8 + $0x60] sm:$0xff] %v315
    %380 = vst [vmem:[#allocation8 + $0x68] sm:$0xff] %v316
    %381 = vst [vmem:[#allocation8 + $0x70] sm:$0xff] %v317
    %382 = vst [vmem:[#allocation8 + $0x78] sm:$0xff] %v318
    %383 = vst [vmem:[#allocation8 + $0x80] sm:$0xff] %v319
    %384 = vst [vmem:[#allocation8 + $0x88] sm:$0xff] %v320
    %385 = vst [vmem:[#allocation8 + $0x90] sm:$0xff] %v321
    %386 = vst [vmem:[#allocation8 + $0x98] sm:$0xff] %v322
    %387 = vst [vmem:[#allocation8 + $0xa0] sm:$0xff] %v323
    %388 = vst [vmem:[#allocation8 + $0xa8] sm:$0xff] %v324
    %389 = vst [vmem:[#allocation8 + $0xb0] sm:$0xff] %v325
    %390 = vst [vmem:[#allocation8 + $0xb8] sm:$0xff] %v326
    %391 = vst [vmem:[#allocation8 + $0xc0] sm:$0xff] %v327
    %392 = vst [vmem:[#allocation8 + $0xc8] sm:$0xff] %v328
    %393 = vst [vmem:[#allocation8 + $0xd0] sm:$0xff] %v329
    %394 = vst [vmem:[#allocation8 + $0xd8] sm:$0xff] %v330
    %395 = vst [vmem:[#allocation8 + $0xe0] sm:$0xff] %v331
    %396 = vst [vmem:[#allocation8 + $0xe8] sm:$0xff] %v332
    %397 = vst [vmem:[#allocation8 + $0xf0] sm:$0xff] %v333
    %398 = vst [vmem:[#allocation8 + $0xf8] sm:$0xff] %v334
    %399 = vst [vmem:[#allocation8 + $0x100] sm:$0xff] %v335
    %400 = vst [vmem:[#allocation8 + $0x108] sm:$0xff] %v336
    %401 = vst [vmem:[#allocation8 + $0x110] sm:$0xff] %v337
    %402 = vst [vmem:[#allocation8 + $0x118] sm:$0xff] %v338
    %403 = vst [vmem:[#allocation8 + $0x120] sm:$0xff] %v339
    %404 = vst [vmem:[#allocation8 + $0x128] sm:$0xff] %v340
    %405 = vst [vmem:[#allocation8 + $0x130] sm:$0xff] %v341
    %406 = vst [vmem:[#allocation8 + $0x138] sm:$0xff] %v342
    %407 = vst [vmem:[#allocation8 + $0x140] sm:$0xff] %v343
    %408 = vst [vmem:[#allocation8 + $0x148] sm:$0xff] %v344
    %409 = vst [vmem:[#allocation8 + $0x150] sm:$0xff] %v345
    %410 = vst [vmem:[#allocation8 + $0x158] sm:$0xff] %v346
    %411 = vst [vmem:[#allocation8 + $0x160] sm:$0xff] %v347
    %412 = vst [vmem:[#allocation8 + $0x168] sm:$0xff] %v348
    %413 = vst [vmem:[#allocation8 + $0x170] sm:$0xff] %v349
    %414 = vst [vmem:[#allocation8 + $0x178] sm:$0xff] %v350
    %415 = vst [vmem:[#allocation8 + $0x180] sm:$0xff] %v351
    %416 = vst [vmem:[#allocation8 + $0x188] sm:$0xff] %v352
    %417 = vst [vmem:[#allocation8 + $0x190] sm:$0xff] %v353
    %418 = vst [vmem:[#allocation8 + $0x198] sm:$0xff] %v354
    %419 = vst [vmem:[#allocation8 + $0x1a0] sm:$0xff] %v355
    %420 = vst [vmem:[#allocation8 + $0x1a8] sm:$0xff] %v356
    %421 = vst [vmem:[#allocation8 + $0x1b0] sm:$0xff] %v357
    %422 = vst [vmem:[#allocation8 + $0x1b8] sm:$0xff] %v358
    %423 = vst [vmem:[#allocation8 + $0x1c0] sm:$0xff] %v359
    %424 = vst [vmem:[#allocation8 + $0x1c8] sm:$0xff] %v360
    %425 = vst [vmem:[#allocation8 + $0x1d0] sm:$0xff] %v361
    %426 = vst [vmem:[#allocation8 + $0x1d8] sm:$0xff] %v362
    %427 = vst [vmem:[#allocation8 + $0x1e0] sm:$0xff] %v363
    %428 = vst [vmem:[#allocation8 + $0x1e8] sm:$0xff] %v364
    %429 = vst [vmem:[#allocation8 + $0x1f0] sm:$0xff] %v365
    %430 = vst [vmem:[#allocation8 + $0x1f8] sm:$0xff] %v366
    %v431 = vsub.f32 %v47, %v111
    %v432 = vsub.f32 %v48, %v112
    %v433 = vsub.f32 %v49, %v113
    %v434 = vsub.f32 %v50, %v114
    %v435 = vsub.f32 %v51, %v115
    %v436 = vsub.f32 %v52, %v116
    %v437 = vsub.f32 %v53, %v117
    %v438 = vsub.f32 %v54, %v118
    %v439 = vsub.f32 %v55, %v119
    %v440 = vsub.f32 %v56, %v120
    %v441 = vsub.f32 %v57, %v121
    %v442 = vsub.f32 %v58, %v122
    %v443 = vsub.f32 %v59, %v123
    %v444 = vsub.f32 %v60, %v124
    %v445 = vsub.f32 %v61, %v125
    %v446 = vsub.f32 %v62, %v126
    %v447 = vsub.f32 %v63, %v127
    %v448 = vsub.f32 %v64, %v128
    %v449 = vsub.f32 %v65, %v129
    %v450 = vsub.f32 %v66, %v130
    %v451 = vsub.f32 %v67, %v131
    %v452 = vsub.f32 %v68, %v132
    %v453 = vsub.f32 %v69, %v133
    %v454 = vsub.f32 %v70, %v134
    %v455 = vsub.f32 %v71, %v135
    %v456 = vsub.f32 %v72, %v136
    %v457 = vsub.f32 %v73, %v137
    %v458 = vsub.f32 %v74, %v138
    %v459 = vsub.f32 %v75, %v139
    %v460 = vsub.f32 %v76, %v140
    %v461 = vsub.f32 %v77, %v141
    %v462 = vsub.f32 %v78, %v142
    %v463 = vsub.f32 %v79, %v143
    %v464 = vsub.f32 %v80, %v144
    %v465 = vsub.f32 %v81, %v145
    %v466 = vsub.f32 %v82, %v146
    %v467 = vsub.f32 %v83, %v147
    %v468 = vsub.f32 %v84, %v148
    %v469 = vsub.f32 %v85, %v149
    %v470 = vsub.f32 %v86, %v150
    %v471 = vsub.f32 %v87, %v151
    %v472 = vsub.f32 %v88, %v152
    %v473 = vsub.f32 %v89, %v153
    %v474 = vsub.f32 %v90, %v154
    %v475 = vsub.f32 %v91, %v155
    %v476 = vsub.f32 %v92, %v156
    %v477 = vsub.f32 %v93, %v157
    %v478 = vsub.f32 %v94, %v158
    %v479 = vsub.f32 %v95, %v159
    %v480 = vsub.f32 %v96, %v160
    %v481 = vsub.f32 %v97, %v161
    %v482 = vsub.f32 %v98, %v162
    %v483 = vsub.f32 %v99, %v163
    %v484 = vsub.f32 %v100, %v164
    %v485 = vsub.f32 %v101, %v165
    %v486 = vsub.f32 %v102, %v166
    %v487 = vsub.f32 %v103, %v167
    %v488 = vsub.f32 %v104, %v168
    %v489 = vsub.f32 %v105, %v169
    %v490 = vsub.f32 %v106, %v170
    %v491 = vsub.f32 %v107, %v171
    %v492 = vsub.f32 %v108, %v172
    %v493 = vsub.f32 %v109, %v173
    %v494 = vsub.f32 %v110, %v174
    %495 = vst [vmem:[#allocation10] sm:$0xff] %v431
    %496 = vst [vmem:[#allocation10 + $0x8] sm:$0xff] %v432
    %497 = vst [vmem:[#allocation10 + $0x10] sm:$0xff] %v433
    %498 = vst [vmem:[#allocation10 + $0x18] sm:$0xff] %v434
    %499 = vst [vmem:[#allocation10 + $0x20] sm:$0xff] %v435
    %500 = vst [vmem:[#allocation10 + $0x28] sm:$0xff] %v436
    %501 = vst [vmem:[#allocation10 + $0x30] sm:$0xff] %v437
    %502 = vst [vmem:[#allocation10 + $0x38] sm:$0xff] %v438
    %503 = vst [vmem:[#allocation10 + $0x40] sm:$0xff] %v439
    %504 = vst [vmem:[#allocation10 + $0x48] sm:$0xff] %v440
    %505 = vst [vmem:[#allocation10 + $0x50] sm:$0xff] %v441
    %506 = vst [vmem:[#allocation10 + $0x58] sm:$0xff] %v442
    %507 = vst [vmem:[#allocation10 + $0x60] sm:$0xff] %v443
    %508 = vst [vmem:[#allocation10 + $0x68] sm:$0xff] %v444
    %509 = vst [vmem:[#allocation10 + $0x70] sm:$0xff] %v445
    %510 = vst [vmem:[#allocation10 + $0x78] sm:$0xff] %v446
    %511 = vst [vmem:[#allocation10 + $0x80] sm:$0xff] %v447
    %512 = vst [vmem:[#allocation10 + $0x88] sm:$0xff] %v448
    %513 = vst [vmem:[#allocation10 + $0x90] sm:$0xff] %v449
    %514 = vst [vmem:[#allocation10 + $0x98] sm:$0xff] %v450
    %515 = vst [vmem:[#allocation10 + $0xa0] sm:$0xff] %v451
    %516 = vst [vmem:[#allocation10 + $0xa8] sm:$0xff] %v452
    %517 = vst [vmem:[#allocation10 + $0xb0] sm:$0xff] %v453
    %518 = vst [vmem:[#allocation10 + $0xb8] sm:$0xff] %v454
    %519 = vst [vmem:[#allocation10 + $0xc0] sm:$0xff] %v455
    %520 = vst [vmem:[#allocation10 + $0xc8] sm:$0xff] %v456
    %521 = vst [vmem:[#allocation10 + $0xd0] sm:$0xff] %v457
    %522 = vst [vmem:[#allocation10 + $0xd8] sm:$0xff] %v458
    %523 = vst [vmem:[#allocation10 + $0xe0] sm:$0xff] %v459
    %524 = vst [vmem:[#allocation10 + $0xe8] sm:$0xff] %v460
    %525 = vst [vmem:[#allocation10 + $0xf0] sm:$0xff] %v461
    %526 = vst [vmem:[#allocation10 + $0xf8] sm:$0xff] %v462
    %527 = vst [vmem:[#allocation10 + $0x100] sm:$0xff] %v463
    %528 = vst [vmem:[#allocation10 + $0x108] sm:$0xff] %v464
    %529 = vst [vmem:[#allocation10 + $0x110] sm:$0xff] %v465
    %530 = vst [vmem:[#allocation10 + $0x118] sm:$0xff] %v466
    %531 = vst [vmem:[#allocation10 + $0x120] sm:$0xff] %v467
    %532 = vst [vmem:[#allocation10 + $0x128] sm:$0xff] %v468
    %533 = vst [vmem:[#allocation10 + $0x130] sm:$0xff] %v469
    %534 = vst [vmem:[#allocation10 + $0x138] sm:$0xff] %v470
    %535 = vst [vmem:[#allocation10 + $0x140] sm:$0xff] %v471
    %536 = vst [vmem:[#allocation10 + $0x148] sm:$0xff] %v472
    %537 = vst [vmem:[#allocation10 + $0x150] sm:$0xff] %v473
    %538 = vst [vmem:[#allocation10 + $0x158] sm:$0xff] %v474
    %539 = vst [vmem:[#allocation10 + $0x160] sm:$0xff] %v475
    %540 = vst [vmem:[#allocation10 + $0x168] sm:$0xff] %v476
    %541 = vst [vmem:[#allocation10 + $0x170] sm:$0xff] %v477
    %542 = vst [vmem:[#allocation10 + $0x178] sm:$0xff] %v478
    %543 = vst [vmem:[#allocation10 + $0x180] sm:$0xff] %v479
    %544 = vst [vmem:[#allocation10 + $0x188] sm:$0xff] %v480
    %545 = vst [vmem:[#allocation10 + $0x190] sm:$0xff] %v481
    %546 = vst [vmem:[#allocation10 + $0x198] sm:$0xff] %v482
    %547 = vst [vmem:[#allocation10 + $0x1a0] sm:$0xff] %v483
    %548 = vst [vmem:[#allocation10 + $0x1a8] sm:$0xff] %v484
    %549 = vst [vmem:[#allocation10 + $0x1b0] sm:$0xff] %v485
    %550 = vst [vmem:[#allocation10 + $0x1b8] sm:$0xff] %v486
    %551 = vst [vmem:[#allocation10 + $0x1c0] sm:$0xff] %v487
    %552 = vst [vmem:[#allocation10 + $0x1c8] sm:$0xff] %v488
    %553 = vst [vmem:[#allocation10 + $0x1d0] sm:$0xff] %v489
    %554 = vst [vmem:[#allocation10 + $0x1d8] sm:$0xff] %v490
    %555 = vst [vmem:[#allocation10 + $0x1e0] sm:$0xff] %v491
    %556 = vst [vmem:[#allocation10 + $0x1e8] sm:$0xff] %v492
    %557 = vst [vmem:[#allocation10 + $0x1f0] sm:$0xff] %v493
    %558 = vst [vmem:[#allocation10 + $0x1f8] sm:$0xff] %v494
    %v559 = vrcp.pop %v111
    %v560 = vmul.f32 %v47, %v559
    %v561 = vrcp.pop %v112
    %v562 = vmul.f32 %v48, %v561
    %v563 = vrcp.pop %v113
    %v564 = vmul.f32 %v49, %v563
    %v565 = vrcp.pop %v114
    %v566 = vmul.f32 %v50, %v565
    %v567 = vrcp.pop %v115
    %v568 = vmul.f32 %v51, %v567
    %v569 = vrcp.pop %v116
    %v570 = vmul.f32 %v52, %v569
    %v571 = vrcp.pop %v117
    %v572 = vmul.f32 %v53, %v571
    %v573 = vrcp.pop %v118
    %v574 = vmul.f32 %v54, %v573
    %v575 = vrcp.pop %v119
    %v576 = vmul.f32 %v55, %v575
    %v577 = vrcp.pop %v120
    %v578 = vmul.f32 %v56, %v577
    %v579 = vrcp.pop %v121
    %v580 = vmul.f32 %v57, %v579
    %v581 = vrcp.pop %v122
    %v582 = vmul.f32 %v58, %v581
    %v583 = vrcp.pop %v123
    %v584 = vmul.f32 %v59, %v583
    %v585 = vrcp.pop %v124
    %v586 = vmul.f32 %v60, %v585
    %v587 = vrcp.pop %v125
    %v588 = vmul.f32 %v61, %v587
    %v589 = vrcp.pop %v126
    %v590 = vmul.f32 %v62, %v589
    %v591 = vrcp.pop %v127
    %v592 = vmul.f32 %v63, %v591
    %v593 = vrcp.pop %v128
    %v594 = vmul.f32 %v64, %v593
    %v595 = vrcp.pop %v129
    %v596 = vmul.f32 %v65, %v595
    %v597 = vrcp.pop %v130
    %v598 = vmul.f32 %v66, %v597
    %v599 = vrcp.pop %v131
    %v600 = vmul.f32 %v67, %v599
    %v601 = vrcp.pop %v132
    %v602 = vmul.f32 %v68, %v601
    %v603 = vrcp.pop %v133
    %v604 = vmul.f32 %v69, %v603
    %v605 = vrcp.pop %v134
    %v606 = vmul.f32 %v70, %v605
    %v607 = vrcp.pop %v135
    %v608 = vmul.f32 %v71, %v607
    %v609 = vrcp.pop %v136
    %v610 = vmul.f32 %v72, %v609
    %v611 = vrcp.pop %v137
    %v612 = vmul.f32 %v73, %v611
    %v613 = vrcp.pop %v138
    %v614 = vmul.f32 %v74, %v613
    %v615 = vrcp.pop %v139
    %v616 = vmul.f32 %v75, %v615
    %v617 = vrcp.pop %v140
    %v618 = vmul.f32 %v76, %v617
    %v619 = vrcp.pop %v141
    %v620 = vmul.f32 %v77, %v619
    %v621 = vrcp.pop %v142
    %v622 = vmul.f32 %v78, %v621
    %v623 = vrcp.pop %v143
    %v624 = vmul.f32 %v79, %v623
    %v625 = vrcp.pop %v144
    %v626 = vmul.f32 %v80, %v625
    %v627 = vrcp.pop %v145
    %v628 = vmul.f32 %v81, %v627
    %v629 = vrcp.pop %v146
    %v630 = vmul.f32 %v82, %v629
    %v631 = vrcp.pop %v147
    %v632 = vmul.f32 %v83, %v631
    %v633 = vrcp.pop %v148
    %v634 = vmul.f32 %v84, %v633
    %v635 = vrcp.pop %v149
    %v636 = vmul.f32 %v85, %v635
    %v637 = vrcp.pop %v150
    %v638 = vmul.f32 %v86, %v637
    %v639 = vrcp.pop %v151
    %v640 = vmul.f32 %v87, %v639
    %v641 = vrcp.pop %v152
    %v642 = vmul.f32 %v88, %v641
    %v643 = vrcp.pop %v153
    %v644 = vmul.f32 %v89, %v643
    %v645 = vrcp.pop %v154
    %v646 = vmul.f32 %v90, %v645
    %v647 = vrcp.pop %v155
    %v648 = vmul.f32 %v91, %v647
    %v649 = vrcp.pop %v156
    %v650 = vmul.f32 %v92, %v649
    %v651 = vrcp.pop %v157
    %v652 = vmul.f32 %v93, %v651
    %v653 = vrcp.pop %v158
    %v654 = vmul.f32 %v94, %v653
    %v655 = vrcp.pop %v159
    %v656 = vmul.f32 %v95, %v655
    %v657 = vrcp.pop %v160
    %v658 = vmul.f32 %v96, %v657
    %v659 = vrcp.pop %v161
    %v660 = vmul.f32 %v97, %v659
    %v661 = vrcp.pop %v162
    %v662 = vmul.f32 %v98, %v661
    %v663 = vrcp.pop %v163
    %v664 = vmul.f32 %v99, %v663
    %v665 = vrcp.pop %v164
    %v666 = vmul.f32 %v100, %v665
    %v667 = vrcp.pop %v165
    %v668 = vmul.f32 %v101, %v667
    %v669 = vrcp.pop %v166
    %v670 = vmul.f32 %v102, %v669
    %v671 = vrcp.pop %v167
    %v672 = vmul.f32 %v103, %v671
    %v673 = vrcp.pop %v168
    %v674 = vmul.f32 %v104, %v673
    %v675 = vrcp.pop %v169
    %v676 = vmul.f32 %v105, %v675
    %v677 = vrcp.pop %v170
    %v678 = vmul.f32 %v106, %v677
    %v679 = vrcp.pop %v171
    %v680 = vmul.f32 %v107, %v679
    %v681 = vrcp.pop %v172
    %v682 = vmul.f32 %v108, %v681
    %v683 = vrcp.pop %v173
    %v684 = vmul.f32 %v109, %v683
    %v685 = vrcp.pop %v174
    %v686 = vmul.f32 %v110, %v685
    %687 = vst [vmem:[#allocation11] sm:$0xff] %v560
    %688 = vst [vmem:[#allocation11 + $0x8] sm:$0xff] %v562
    %689 = vst [vmem:[#allocation11 + $0x10] sm:$0xff] %v564
    %690 = vst [vmem:[#allocation11 + $0x18] sm:$0xff] %v566
    %691 = vst [vmem:[#allocation11 + $0x20] sm:$0xff] %v568
    %692 = vst [vmem:[#allocation11 + $0x28] sm:$0xff] %v570
    %693 = vst [vmem:[#allocation11 + $0x30] sm:$0xff] %v572
    %694 = vst [vmem:[#allocation11 + $0x38] sm:$0xff] %v574
    %695 = vst [vmem:[#allocation11 + $0x40] sm:$0xff] %v576
    %696 = vst [vmem:[#allocation11 + $0x48] sm:$0xff] %v578
    %697 = vst [vmem:[#allocation11 + $0x50] sm:$0xff] %v580
    %698 = vst [vmem:[#allocation11 + $0x58] sm:$0xff] %v582
    %699 = vst [vmem:[#allocation11 + $0x60] sm:$0xff] %v584
    %700 = vst [vmem:[#allocation11 + $0x68] sm:$0xff] %v586
    %701 = vst [vmem:[#allocation11 + $0x70] sm:$0xff] %v588
    %702 = vst [vmem:[#allocation11 + $0x78] sm:$0xff] %v590
    %703 = vst [vmem:[#allocation11 + $0x80] sm:$0xff] %v592
    %704 = vst [vmem:[#allocation11 + $0x88] sm:$0xff] %v594
    %705 = vst [vmem:[#allocation11 + $0x90] sm:$0xff] %v596
    %706 = vst [vmem:[#allocation11 + $0x98] sm:$0xff] %v598
    %707 = vst [vmem:[#allocation11 + $0xa0] sm:$0xff] %v600
    %708 = vst [vmem:[#allocation11 + $0xa8] sm:$0xff] %v602
    %709 = vst [vmem:[#allocation11 + $0xb0] sm:$0xff] %v604
    %710 = vst [vmem:[#allocation11 + $0xb8] sm:$0xff] %v606
    %711 = vst [vmem:[#allocation11 + $0xc0] sm:$0xff] %v608
    %712 = vst [vmem:[#allocation11 + $0xc8] sm:$0xff] %v610
    %713 = vst [vmem:[#allocation11 + $0xd0] sm:$0xff] %v612
    %714 = vst [vmem:[#allocation11 + $0xd8] sm:$0xff] %v614
    %715 = vst [vmem:[#allocation11 + $0xe0] sm:$0xff] %v616
    %716 = vst [vmem:[#allocation11 + $0xe8] sm:$0xff] %v618
    %717 = vst [vmem:[#allocation11 + $0xf0] sm:$0xff] %v620
    %718 = vst [vmem:[#allocation11 + $0xf8] sm:$0xff] %v622
    %719 = vst [vmem:[#allocation11 + $0x100] sm:$0xff] %v624
    %720 = vst [vmem:[#allocation11 + $0x108] sm:$0xff] %v626
    %721 = vst [vmem:[#allocation11 + $0x110] sm:$0xff] %v628
    %722 = vst [vmem:[#allocation11 + $0x118] sm:$0xff] %v630
    %723 = vst [vmem:[#allocation11 + $0x120] sm:$0xff] %v632
    %724 = vst [vmem:[#allocation11 + $0x128] sm:$0xff] %v634
    %725 = vst [vmem:[#allocation11 + $0x130] sm:$0xff] %v636
    %726 = vst [vmem:[#allocation11 + $0x138] sm:$0xff] %v638
    %727 = vst [vmem:[#allocation11 + $0x140] sm:$0xff] %v640
    %728 = vst [vmem:[#allocation11 + $0x148] sm:$0xff] %v642
    %729 = vst [vmem:[#allocation11 + $0x150] sm:$0xff] %v644
    %730 = vst [vmem:[#allocation11 + $0x158] sm:$0xff] %v646
    %731 = vst [vmem:[#allocation11 + $0x160] sm:$0xff] %v648
    %732 = vst [vmem:[#allocation11 + $0x168] sm:$0xff] %v650
    %733 = vst [vmem:[#allocation11 + $0x170] sm:$0xff] %v652
    %734 = vst [vmem:[#allocation11 + $0x178] sm:$0xff] %v654
    %735 = vst [vmem:[#allocation11 + $0x180] sm:$0xff] %v656
    %736 = vst [vmem:[#allocation11 + $0x188] sm:$0xff] %v658
    %737 = vst [vmem:[#allocation11 + $0x190] sm:$0xff] %v660
    %738 = vst [vmem:[#allocation11 + $0x198] sm:$0xff] %v662
    %739 = vst [vmem:[#allocation11 + $0x1a0] sm:$0xff] %v664
    %740 = vst [vmem:[#allocation11 + $0x1a8] sm:$0xff] %v666
    %741 = vst [vmem:[#allocation11 + $0x1b0] sm:$0xff] %v668
    %742 = vst [vmem:[#allocation11 + $0x1b8] sm:$0xff] %v670
    %743 = vst [vmem:[#allocation11 + $0x1c0] sm:$0xff] %v672
    %744 = vst [vmem:[#allocation11 + $0x1c8] sm:$0xff] %v674
    %745 = vst [vmem:[#allocation11 + $0x1d0] sm:$0xff] %v676
    %746 = vst [vmem:[#allocation11 + $0x1d8] sm:$0xff] %v678
    %747 = vst [vmem:[#allocation11 + $0x1e0] sm:$0xff] %v680
    %748 = vst [vmem:[#allocation11 + $0x1e8] sm:$0xff] %v682
    %749 = vst [vmem:[#allocation11 + $0x1f0] sm:$0xff] %v684
    %750 = vst [vmem:[#allocation11 + $0x1f8] sm:$0xff] %v686
    %v751 = vmax.f32 %v47, 0.0
    %v752 = vmax.f32 %v48, 0.0
    %v753 = vmax.f32 %v49, 0.0
    %v754 = vmax.f32 %v50, 0.0
    %v755 = vmax.f32 %v51, 0.0
    %v756 = vmax.f32 %v52, 0.0
    %v757 = vmax.f32 %v53, 0.0
    %v758 = vmax.f32 %v54, 0.0
    %v759 = vmax.f32 %v55, 0.0
    %v760 = vmax.f32 %v56, 0.0
    %v761 = vmax.f32 %v57, 0.0
    %v762 = vmax.f32 %v58, 0.0
    %v763 = vmax.f32 %v59, 0.0
    %v764 = vmax.f32 %v60, 0.0
    %v765 = vmax.f32 %v61, 0.0
    %v766 = vmax.f32 %v62, 0.0
    %v767 = vmax.f32 %v63, 0.0
    %v768 = vmax.f32 %v64, 0.0
    %v769 = vmax.f32 %v65, 0.0
    %v770 = vmax.f32 %v66, 0.0
    %v771 = vmax.f32 %v67, 0.0
    %v772 = vmax.f32 %v68, 0.0
    %v773 = vmax.f32 %v69, 0.0
    %v774 = vmax.f32 %v70, 0.0
    %v775 = vmax.f32 %v71, 0.0
    %v776 = vmax.f32 %v72, 0.0
    %v777 = vmax.f32 %v73, 0.0
    %v778 = vmax.f32 %v74, 0.0
    %v779 = vmax.f32 %v75, 0.0
    %v780 = vmax.f32 %v76, 0.0
    %v781 = vmax.f32 %v77, 0.0
    %v782 = vmax.f32 %v78, 0.0
    %v783 = vmax.f32 %v79, 0.0
    %v784 = vmax.f32 %v80, 0.0
    %v785 = vmax.f32 %v81, 0.0
    %v786 = vmax.f32 %v82, 0.0
    %v787 = vmax.f32 %v83, 0.0
    %v788 = vmax.f32 %v84, 0.0
    %v789 = vmax.f32 %v85, 0.0
    %v790 = vmax.f32 %v86, 0.0
    %v791 = vmax.f32 %v87, 0.0
    %v792 = vmax.f32 %v88, 0.0
    %v793 = vmax.f32 %v89, 0.0
    %v794 = vmax.f32 %v90, 0.0
    %v795 = vmax.f32 %v91, 0.0
    %v796 = vmax.f32 %v92, 0.0
    %v797 = vmax.f32 %v93, 0.0
    %v798 = vmax.f32 %v94, 0.0
    %v799 = vmax.f32 %v95, 0.0
    %v800 = vmax.f32 %v96, 0.0
    %v801 = vmax.f32 %v97, 0.0
    %v802 = vmax.f32 %v98, 0.0
    %v803 = vmax.f32 %v99, 0.0
    %v804 = vmax.f32 %v100, 0.0
    %v805 = vmax.f32 %v101, 0.0
    %v806 = vmax.f32 %v102, 0.0
    %v807 = vmax.f32 %v103, 0.0
    %v808 = vmax.f32 %v104, 0.0
    %v809 = vmax.f32 %v105, 0.0
    %v810 = vmax.f32 %v106, 0.0
    %v811 = vmax.f32 %v107, 0.0
    %v812 = vmax.f32 %v108, 0.0
    %v813 = vmax.f32 %v109, 0.0
    %v814 = vmax.f32 %v110, 0.0
    %815 = vst [vmem:[#allocation13] sm:$0xff] %v751
    %816 = vst [vmem:[#allocation13 + $0x8] sm:$0xff] %v752
    %817 = vst [vmem:[#allocation13 + $0x10] sm:$0xff] %v753
    %818 = vst [vmem:[#allocation13 + $0x18] sm:$0xff] %v754
    %819 = vst [vmem:[#allocation13 + $0x20] sm:$0xff] %v755
    %820 = vst [vmem:[#allocation13 + $0x28] sm:$0xff] %v756
    %821 = vst [vmem:[#allocation13 + $0x30] sm:$0xff] %v757
    %822 = vst [vmem:[#allocation13 + $0x38] sm:$0xff] %v758
    %823 = vst [vmem:[#allocation13 + $0x40] sm:$0xff] %v759
    %824 = vst [vmem:[#allocation13 + $0x48] sm:$0xff] %v760
    %825 = vst [vmem:[#allocation13 + $0x50] sm:$0xff] %v761
    %826 = vst [vmem:[#allocation13 + $0x58] sm:$0xff] %v762
    %827 = vst [vmem:[#allocation13 + $0x60] sm:$0xff] %v763
    %828 = vst [vmem:[#allocation13 + $0x68] sm:$0xff] %v764
    %829 = vst [vmem:[#allocation13 + $0x70] sm:$0xff] %v765
    %830 = vst [vmem:[#allocation13 + $0x78] sm:$0xff] %v766
    %831 = vst [vmem:[#allocation13 + $0x80] sm:$0xff] %v767
    %832 = vst [vmem:[#allocation13 + $0x88] sm:$0xff] %v768
    %833 = vst [vmem:[#allocation13 + $0x90] sm:$0xff] %v769
    %834 = vst [vmem:[#allocation13 + $0x98] sm:$0xff] %v770
    %835 = vst [vmem:[#allocation13 + $0xa0] sm:$0xff] %v771
    %836 = vst [vmem:[#allocation13 + $0xa8] sm:$0xff] %v772
    %837 = vst [vmem:[#allocation13 + $0xb0] sm:$0xff] %v773
    %838 = vst [vmem:[#allocation13 + $0xb8] sm:$0xff] %v774
    %839 = vst [vmem:[#allocation13 + $0xc0] sm:$0xff] %v775
    %840 = vst [vmem:[#allocation13 + $0xc8] sm:$0xff] %v776
    %841 = vst [vmem:[#allocation13 + $0xd0] sm:$0xff] %v777
    %842 = vst [vmem:[#allocation13 + $0xd8] sm:$0xff] %v778
    %843 = vst [vmem:[#allocation13 + $0xe0] sm:$0xff] %v779
    %844 = vst [vmem:[#allocation13 + $0xe8] sm:$0xff] %v780
    %845 = vst [vmem:[#allocation13 + $0xf0] sm:$0xff] %v781
    %846 = vst [vmem:[#allocation13 + $0xf8] sm:$0xff] %v782
    %847 = vst [vmem:[#allocation13 + $0x100] sm:$0xff] %v783
    %848 = vst [vmem:[#allocation13 + $0x108] sm:$0xff] %v784
    %849 = vst [vmem:[#allocation13 + $0x110] sm:$0xff] %v785
    %850 = vst [vmem:[#allocation13 + $0x118] sm:$0xff] %v786
    %851 = vst [vmem:[#allocation13 + $0x120] sm:$0xff] %v787
    %852 = vst [vmem:[#allocation13 + $0x128] sm:$0xff] %v788
    %853 = vst [vmem:[#allocation13 + $0x130] sm:$0xff] %v789
    %854 = vst [vmem:[#allocation13 + $0x138] sm:$0xff] %v790
    %855 = vst [vmem:[#allocation13 + $0x140] sm:$0xff] %v791
    %856 = vst [vmem:[#allocation13 + $0x148] sm:$0xff] %v792
    %857 = vst [vmem:[#allocation13 + $0x150] sm:$0xff] %v793
    %858 = vst [vmem:[#allocation13 + $0x158] sm:$0xff] %v794
    %859 = vst [vmem:[#allocation13 + $0x160] sm:$0xff] %v795
    %860 = vst [vmem:[#allocation13 + $0x168] sm:$0xff] %v796
    %861 = vst [vmem:[#allocation13 + $0x170] sm:$0xff] %v797
    %862 = vst [vmem:[#allocation13 + $0x178] sm:$0xff] %v798
    %863 = vst [vmem:[#allocation13 + $0x180] sm:$0xff] %v799
    %864 = vst [vmem:[#allocation13 + $0x188] sm:$0xff] %v800
    %865 = vst [vmem:[#allocation13 + $0x190] sm:$0xff] %v801
    %866 = vst [vmem:[#allocation13 + $0x198] sm:$0xff] %v802
    %867 = vst [vmem:[#allocation13 + $0x1a0] sm:$0xff] %v803
    %868 = vst [vmem:[#allocation13 + $0x1a8] sm:$0xff] %v804
    %869 = vst [vmem:[#allocation13 + $0x1b0] sm:$0xff] %v805
    %870 = vst [vmem:[#allocation13 + $0x1b8] sm:$0xff] %v806
    %871 = vst [vmem:[#allocation13 + $0x1c0] sm:$0xff] %v807
    %872 = vst [vmem:[#allocation13 + $0x1c8] sm:$0xff] %v808
    %873 = vst [vmem:[#allocation13 + $0x1d0] sm:$0xff] %v809
    %874 = vst [vmem:[#allocation13 + $0x1d8] sm:$0xff] %v810
    %875 = vst [vmem:[#allocation13 + $0x1e0] sm:$0xff] %v811
    %876 = vst [vmem:[#allocation13 + $0x1e8] sm:$0xff] %v812
    %877 = vst [vmem:[#allocation13 + $0x1f0] sm:$0xff] %v813
    %878 = vst [vmem:[#allocation13 + $0x1f8] sm:$0xff] %v814
    // Predicated region
    $region18: #{tpu_custom_call.1} parent=1 // pred_check
      _
    $region19: #{tpu_custom_call.1} parent=1 // pred_check_branch
      %880 = sbr.rel (0) target = $region21
    $region20: #{tpu_custom_call.1} parent=1 // pred_region
      %s882 = ssub.s32 8192, 8192
      %883 = vsyncadd [#allocation4], %s882
      %s884 = sshll.u32 [#allocation7], 4
      %s885 = int_to_ptr.vmem [resolvable:$true] %s884
      %890 = dma.vmem_to_hbm [thread:$0]  %s885, 8192, %s2, [#allocation4], 256, 256, 16
    $region21: #{tpu_custom_call.1} parent=1 // pred_fallthru
      _
    // Predicated region
    $region22: #{tpu_custom_call.1} parent=1 // pred_check
      _
    $region23: #{tpu_custom_call.1} parent=1 // pred_check_branch
      %892 = sbr.rel (0) target = $region25
    $region24: #{tpu_custom_call.1} parent=1 // pred_region
      %s894 = ssub.s32 8192, 8192
      %895 = vsyncadd [#allocation9], %s894
      %s896 = sshll.u32 [#allocation8], 4
      %s897 = int_to_ptr.vmem [resolvable:$true] %s896
      %902 = dma.vmem_to_hbm [thread:$0]  %s897, 8192, %s3, [#allocation9], 256, 256, 16
    $region25: #{tpu_custom_call.1} parent=1 // pred_fallthru
      _
    // Predicated region
    $region26: #{tpu_custom_call.1} parent=1 // pred_check
      _
    $region27: #{tpu_custom_call.1} parent=1 // pred_check_branch
      %904 = sbr.rel (0) target = $region29
    $region28: #{tpu_custom_call.1} parent=1 // pred_region
      %s906 = ssub.s32 8192, 8192
      %907 = vsyncadd [#allocation9], %s906
      %s908 = sshll.u32 [#allocation10], 4
      %s909 = int_to_ptr.vmem [resolvable:$true] %s908
      %914 = dma.vmem_to_hbm [thread:$0]  %s909, 8192, %s4, [#allocation9], 256, 256, 16
    $region29: #{tpu_custom_call.1} parent=1 // pred_fallthru
      _
    // Predicated region
    $region30: #{tpu_custom_call.1} parent=1 // pred_check
      _
    $region31: #{tpu_custom_call.1} parent=1 // pred_check_branch
      %916 = sbr.rel (0) target = $region33
    $region32: #{tpu_custom_call.1} parent=1 // pred_region
      %s918 = ssub.s32 8192, 8192
      %919 = vsyncadd [#allocation12], %s918
      %s920 = sshll.u32 [#allocation11], 4
      %s921 = int_to_ptr.vmem [resolvable:$true] %s920
      %926 = dma.vmem_to_hbm [thread:$0]  %s921, 8192, %s5, [#allocation12], 256, 256, 16
    $region33: #{tpu_custom_call.1} parent=1 // pred_fallthru
      _
    // Predicated region
    $region34: #{tpu_custom_call.1} parent=1 // pred_check
      _
    $region35: #{tpu_custom_call.1} parent=1 // pred_check_branch
      %928 = sbr.rel (0) target = $region37
    $region36: #{tpu_custom_call.1} parent=1 // pred_region
      %s930 = ssub.s32 8192, 8192
      %931 = vsyncadd [#allocation12], %s930
      %s932 = sshll.u32 [#allocation13], 4
      %s933 = int_to_ptr.vmem [resolvable:$true] %s932
      %938 = dma.vmem_to_hbm [thread:$0]  %s933, 8192, %s6, [#allocation12], 256, 256, 16
    $region37: #{tpu_custom_call.1} parent=1 // pred_fallthru
      _
    // Predicated region
    $region38: #{tpu_custom_call.1} parent=1 // pred_check
      _
    $region39: #{tpu_custom_call.1} parent=1 // pred_check_branch
      %940 = sbr.rel (0) target = $region41
    $region40: #{tpu_custom_call.1} parent=1 // pred_region
      %941 = dma.done [#allocation4], 8192
    $region41: #{tpu_custom_call.1} parent=1 // pred_fallthru
      _
    // Predicated region
    $region42: #{tpu_custom_call.1} parent=1 // pred_check
      _
    $region43: #{tpu_custom_call.1} parent=1 // pred_check_branch
      %943 = sbr.rel (0) target = $region45
    $region44: #{tpu_custom_call.1} parent=1 // pred_region
      %944 = dma.done [#allocation9], 8192
    $region45: #{tpu_custom_call.1} parent=1 // pred_fallthru
      _
    // Predicated region
    $region46: #{tpu_custom_call.1} parent=1 // pred_check
      _
    $region47: #{tpu_custom_call.1} parent=1 // pred_check_branch
      %946 = sbr.rel (0) target = $region49
    $region48: #{tpu_custom_call.1} parent=1 // pred_region
      %947 = dma.done [#allocation9], 8192
    $region49: #{tpu_custom_call.1} parent=1 // pred_fallthru
      _
    // Predicated region
    $region50: #{tpu_custom_call.1} parent=1 // pred_check
      _
    $region51: #{tpu_custom_call.1} parent=1 // pred_check_branch
      %949 = sbr.rel (0) target = $region53
    $region52: #{tpu_custom_call.1} parent=1 // pred_region
      %950 = dma.done [#allocation12], 8192
    $region53: #{tpu_custom_call.1} parent=1 // pred_fallthru
      _
    // Predicated region
    $region54: #{tpu_custom_call.1} parent=1 // pred_check
      _
    $region55: #{tpu_custom_call.1} parent=1 // pred_check_branch
      %952 = sbr.rel (0) target = $region57
    $region56: #{tpu_custom_call.1} parent=1 // pred_region
      %953 = dma.done [#allocation12], 8192
    $region57: #{tpu_custom_call.1} parent=1 // pred_fallthru
      _
    %954 = vsyncpa [#allocation3], 1
    %955 = vsyncpa [#allocation6], 1
    %956 = vsyncpa [#allocation4], 1
    %957 = vsyncpa [#allocation9], 1
    %958 = vsyncpa [#allocation12], 1

</llo_original>
